<compile_context>
chip_gen: v7x
topology: tpu7x:2x2x1
jax: 0.10.0
libtpu: 0.0.40
codegen_flags: <defaults>
</compile_context>

<pallas_src>
import functools

import jax
import jax.numpy as jnp
from jax import lax
from jax.experimental import pallas as pl
from jax.experimental.pallas import tpu as pltpu


# ----------------------------------------------------------------------------
# Kernel 1: fused Q / K / V projection.
# ----------------------------------------------------------------------------
def _qkv_kernel(x_ref, wq_ref, wk_ref, wv_ref, q_ref, k_ref, v_ref):
    """x_ref: (1, tn, C); w*_ref: (C, C) already transposed (in, out)."""
    x = x_ref[0]  # (tn, C)
    q_ref[0] = jnp.dot(x, wq_ref[...],
                       preferred_element_type=jnp.float32).astype(q_ref.dtype)
    k_ref[0] = jnp.dot(x, wk_ref[...],
                       preferred_element_type=jnp.float32).astype(k_ref.dtype)
    v_ref[0] = jnp.dot(x, wv_ref[...],
                       preferred_element_type=jnp.float32).astype(v_ref.dtype)


# ----------------------------------------------------------------------------
# Kernel 2: multi-head attention for one (batch, q-tile) + fused output proj.
# ----------------------------------------------------------------------------
def _attn_proj_kernel(q_ref, k_ref, v_ref, wp_ref, bp_ref, o_ref,
                      *, num_heads, scale):
    """q_ref: (1, tq, C); k_ref/v_ref: (1, Nk, C); wp_ref: (C, C); bp_ref: (1, C)."""
    tq = q_ref.shape[1]
    C = q_ref.shape[2]
    hd = C // num_heads

    q = q_ref[0].astype(jnp.float32)        # (tq, C)
    k = k_ref[0].astype(jnp.float32)        # (Nk, C)
    v = v_ref[0].astype(jnp.float32)        # (Nk, C)
    wp = wp_ref[...].astype(jnp.float32)    # (C, C)  rows = proj input features

    acc = jnp.zeros((tq, C), jnp.float32)
    for h in range(num_heads):              # static unroll over heads
        sl = slice(h * hd, (h + 1) * hd)
        qh = q[:, sl] * scale               # (tq, hd)
        kh = k[:, sl]                       # (Nk, hd)
        vh = v[:, sl]                       # (Nk, hd)

        # scores: contract the head dim of both operands -> (tq, Nk)
        s = lax.dot_general(qh, kh, (((1,), (1,)), ((), ())),
                            preferred_element_type=jnp.float32)
        s = s - jnp.max(s, axis=-1, keepdims=True)
        p = jnp.exp(s)
        p = p / jnp.sum(p, axis=-1, keepdims=True)

        oh = jnp.dot(p, vh, preferred_element_type=jnp.float32)   # (tq, hd)
        # fold the output projection in per head: concat_h(oh) @ WpT
        #   == sum_h oh @ WpT[h*hd:(h+1)*hd, :]
        acc = acc + jnp.dot(oh, wp[sl, :], preferred_element_type=jnp.float32)

    acc = acc + bp_ref[...].astype(jnp.float32)                   # (1, C) bcast
    o_ref[0] = acc.astype(o_ref.dtype)


# ----------------------------------------------------------------------------
# Wrapper
# ----------------------------------------------------------------------------
def attention_pallas(x, H, W, params, num_heads):
    """x: (B, N, C) with N == H*W. params in PyTorch nn.Linear layout."""
    B, N, C = x.shape
    assert N == H * W
    assert C % num_heads == 0
    hd = C // num_heads
    scale = hd ** -0.5

    tile = 128 if N % 128 == 0 else N
    assert N % tile == 0

    # transpose once on host to (in, out) so kernels do plain x @ W
    wqT = params["q_w"].T                    # (C, C)
    wkT = params["kv_w"][:C, :].T            # (C, C)
    wvT = params["kv_w"][C:, :].T            # (C, C)
    wpT = params["proj_w"].T                 # (C, C)
    bp2 = params["proj_b"].reshape(1, C)

    # ---- kernel 1: fused QKV projection, grid (B, N/tile) --------------------
    q, k, v = pl.pallas_call(
        _qkv_kernel,
        out_shape=(jax.ShapeDtypeStruct((B, N, C), x.dtype),
                   jax.ShapeDtypeStruct((B, N, C), x.dtype),
                   jax.ShapeDtypeStruct((B, N, C), x.dtype)),
        grid_spec=pltpu.PrefetchScalarGridSpec(
            num_scalar_prefetch=0,
            grid=(B, N // tile),
            in_specs=[
                pl.BlockSpec((1, tile, C), lambda b, i: (b, i, 0)),
                pl.BlockSpec((C, C), lambda b, i: (0, 0)),
                pl.BlockSpec((C, C), lambda b, i: (0, 0)),
                pl.BlockSpec((C, C), lambda b, i: (0, 0)),
            ],
            out_specs=[
                pl.BlockSpec((1, tile, C), lambda b, i: (b, i, 0)),
                pl.BlockSpec((1, tile, C), lambda b, i: (b, i, 0)),
                pl.BlockSpec((1, tile, C), lambda b, i: (b, i, 0)),
            ],
        ),
        compiler_params=pltpu.CompilerParams(
            dimension_semantics=("parallel", "parallel")),
    )(x, wqT, wkT, wvT)

    # ---- kernel 2: attention + output projection, grid (B, N/tile) -----------
    kernel2 = functools.partial(_attn_proj_kernel,
                                num_heads=num_heads, scale=scale)
    out = pl.pallas_call(
        kernel2,
        out_shape=jax.ShapeDtypeStruct((B, N, C), x.dtype),
        grid_spec=pltpu.PrefetchScalarGridSpec(
            num_scalar_prefetch=0,
            grid=(B, N // tile),
            in_specs=[
                pl.BlockSpec((1, tile, C), lambda b, i: (b, i, 0)),  # q tile
                pl.BlockSpec((1, N, C), lambda b, i: (b, 0, 0)),     # full K (sr_ratio=1)
                pl.BlockSpec((1, N, C), lambda b, i: (b, 0, 0)),     # full V
                pl.BlockSpec((C, C), lambda b, i: (0, 0)),           # Wproj^T
                pl.BlockSpec((1, C), lambda b, i: (0, 0)),           # bproj
            ],
            out_specs=pl.BlockSpec((1, tile, C), lambda b, i: (b, i, 0)),
        ),
        compiler_params=pltpu.CompilerParams(
            dimension_semantics=("parallel", "parallel")),
    )(q, k, v, wpT, bp2)

    return out


# ----------------------------------------------------------------------------
# Pure-JAX reference mirroring the PyTorch forward (for correctness check)
# ----------------------------------------------------------------------------
def attention_reference(x, H, W, params, num_heads):
    B, N, C = x.shape
    hd = C // num_heads
    scale = hd ** -0.5

    q = x @ params["q_w"].T
    q = q.reshape(B, N, num_heads, hd).transpose(0, 2, 1, 3)        # (B,h,N,hd)
    kv = x @ params["kv_w"].T
    kv = kv.reshape(B, N, 2, num_heads, hd).transpose(2, 0, 3, 1, 4)
    k, v = kv[0], kv[1]                                             # (B,h,N,hd)

    attn = (q @ jnp.swapaxes(k, -2, -1)) * scale
    attn = jax.nn.softmax(attn, axis=-1)
    o = (attn @ v).transpose(0, 2, 1, 3).reshape(B, N, C)
    o = o @ params["proj_w"].T + params["proj_b"]
    return o


if __name__ == "__main__":
    # Small shapes consistent with the module: x is (B, N, C), N = H*W.
    B, Hdim, Wdim = 2, 16, 16
    C, num_heads = 128, 8          # C multiple of 128 -> lane-dense blocks
    N = Hdim * Wdim

    key = jax.random.PRNGKey(0)
    kx, kq, kkv, kp, kb = jax.random.split(key, 5)

    x = jax.random.normal(kx, (B, N, C), dtype=jnp.float32)
    params = {
        # PyTorch nn.Linear layout: (out_features, in_features)
        "q_w": 0.05 * jax.random.normal(kq, (C, C), dtype=jnp.float32),
        "kv_w": 0.05 * jax.random.normal(kkv, (2 * C, C), dtype=jnp.float32),
        "proj_w": 0.05 * jax.random.normal(kp, (C, C), dtype=jnp.float32),
        "proj_b": 0.05 * jax.random.normal(kb, (C,), dtype=jnp.float32),
    }

    y = attention_pallas(x, Hdim, Wdim, params, num_heads=num_heads)
    y = jax.block_until_ready(y)

    y_ref = attention_reference(x, Hdim, Wdim, params, num_heads=num_heads)
    assert y.shape == (B, N, C)
    err = float(jnp.max(jnp.abs(y - y_ref)))
    assert err < 5e-3, f"mismatch vs reference: max abs err = {err}"

    print("KERNEL_OK")
</pallas_src>

<mosaic_0001>
module attributes {stable_mosaic.version = 11 : i64} {
  func.func @_qkv_kernel(%arg0: i32, %arg1: i32, %arg2: memref<1x128x128xf32, #tpu.memory_space<vmem>>, %arg3: memref<128x128xf32, #tpu.memory_space<vmem>>, %arg4: memref<128x128xf32, #tpu.memory_space<vmem>>, %arg5: memref<128x128xf32, #tpu.memory_space<vmem>>, %arg6: memref<1x128x128xf32, #tpu.memory_space<vmem>>, %arg7: memref<1x128x128xf32, #tpu.memory_space<vmem>>, %arg8: memref<1x128x128xf32, #tpu.memory_space<vmem>>) attributes {dimension_semantics = [#tpu.dimension_semantics<parallel>, #tpu.dimension_semantics<parallel>], iteration_bounds = array<i64: 2, 2>, scalar_prefetch = 0 : i64, scratch_operands = 0 : i64, tpu.core_type = #tpu.core_type<tc>, window_params = [{transform_indices = @transform_0, window_bounds = array<i64: 1, 128, 128>}, {pipeline_mode = #tpu.pipeline_mode<synchronous>, transform_indices = @transform_1, window_bounds = array<i64: 128, 128>}, {pipeline_mode = #tpu.pipeline_mode<synchronous>, transform_indices = @transform_2, window_bounds = array<i64: 128, 128>}, {pipeline_mode = #tpu.pipeline_mode<synchronous>, transform_indices = @transform_3, window_bounds = array<i64: 128, 128>}, {transform_indices = @transform_4, window_bounds = array<i64: 1, 128, 128>}, {transform_indices = @transform_5, window_bounds = array<i64: 1, 128, 128>}, {transform_indices = @transform_6, window_bounds = array<i64: 1, 128, 128>}]} {
    %c0 = arith.constant 0 : index
    %c0_0 = arith.constant 0 : index
    %c0_1 = arith.constant 0 : index
    %0 = vector.load %arg2[%c0, %c0_0, %c0_1] : memref<1x128x128xf32, #tpu.memory_space<vmem>>, vector<1x128x128xf32>
    %1 = vector.shape_cast %0 : vector<1x128x128xf32> to vector<128x128xf32>
    %c0_2 = arith.constant 0 : index
    %c0_3 = arith.constant 0 : index
    %2 = vector.load %arg3[%c0_2, %c0_3] : memref<128x128xf32, #tpu.memory_space<vmem>>, vector<128x128xf32>
    %cst = arith.constant dense<0.000000e+00> : vector<128x128xf32>
    %3 = tpu.matmul %1, %2, %cst {dimension_numbers = #tpu.dot_dimension_numbers<[1], [0], [0], [1], [0, 0, 1, 1], [], []>} : vector<128x128xf32>, vector<128x128xf32>, vector<128x128xf32> -> vector<128x128xf32>
    %c0_4 = arith.constant 0 : index
    %c0_5 = arith.constant 0 : index
    %c0_6 = arith.constant 0 : index
    %4 = vector.load %arg6[%c0_4, %c0_5, %c0_6] : memref<1x128x128xf32, #tpu.memory_space<vmem>>, vector<1x128x128xf32>
    %5 = vector.shape_cast %4 : vector<1x128x128xf32> to vector<128x128xf32>
    %6 = vector.shape_cast %3 : vector<128x128xf32> to vector<1x128x128xf32>
    tpu.vector_store %arg6[%c0_4, %c0_5, %c0_6], %6 {strides = array<i32>} : memref<1x128x128xf32, #tpu.memory_space<vmem>>, vector<1x128x128xf32>,
    %c0_7 = arith.constant 0 : index
    %c0_8 = arith.constant 0 : index
    %7 = vector.load %arg4[%c0_7, %c0_8] : memref<128x128xf32, #tpu.memory_space<vmem>>, vector<128x128xf32>
    %cst_9 = arith.constant dense<0.000000e+00> : vector<128x128xf32>
    %8 = tpu.matmul %1, %7, %cst_9 {dimension_numbers = #tpu.dot_dimension_numbers<[1], [0], [0], [1], [0, 0, 1, 1], [], []>} : vector<128x128xf32>, vector<128x128xf32>, vector<128x128xf32> -> vector<128x128xf32>
    %c0_10 = arith.constant 0 : index
    %c0_11 = arith.constant 0 : index
    %c0_12 = arith.constant 0 : index
    %9 = vector.load %arg7[%c0_10, %c0_11, %c0_12] : memref<1x128x128xf32, #tpu.memory_space<vmem>>, vector<1x128x128xf32>
    %10 = vector.shape_cast %9 : vector<1x128x128xf32> to vector<128x128xf32>
    %11 = vector.shape_cast %8 : vector<128x128xf32> to vector<1x128x128xf32>
    tpu.vector_store %arg7[%c0_10, %c0_11, %c0_12], %11 {strides = array<i32>} : memref<1x128x128xf32, #tpu.memory_space<vmem>>, vector<1x128x128xf32>,
    %c0_13 = arith.constant 0 : index
    %c0_14 = arith.constant 0 : index
    %12 = vector.load %arg5[%c0_13, %c0_14] : memref<128x128xf32, #tpu.memory_space<vmem>>, vector<128x128xf32>
    %cst_15 = arith.constant dense<0.000000e+00> : vector<128x128xf32>
    %13 = tpu.matmul %1, %12, %cst_15 {dimension_numbers = #tpu.dot_dimension_numbers<[1], [0], [0], [1], [0, 0, 1, 1], [], []>} : vector<128x128xf32>, vector<128x128xf32>, vector<128x128xf32> -> vector<128x128xf32>
    %c0_16 = arith.constant 0 : index
    %c0_17 = arith.constant 0 : index
    %c0_18 = arith.constant 0 : index
    %14 = vector.load %arg8[%c0_16, %c0_17, %c0_18] : memref<1x128x128xf32, #tpu.memory_space<vmem>>, vector<1x128x128xf32>
    %15 = vector.shape_cast %14 : vector<1x128x128xf32> to vector<128x128xf32>
    %16 = vector.shape_cast %13 : vector<128x128xf32> to vector<1x128x128xf32>
    tpu.vector_store %arg8[%c0_16, %c0_17, %c0_18], %16 {strides = array<i32>} : memref<1x128x128xf32, #tpu.memory_space<vmem>>, vector<1x128x128xf32>,
    return
  }
  func.func @transform_0(%arg0: i32, %arg1: i32) -> (i32, i32, i32) {
    %c0_i32 = arith.constant 0 : i32
    %c0_i32_0 = arith.constant 0 : i32
    return %arg0, %arg1, %c0_i32 : i32, i32, i32
  }
  func.func @transform_1(%arg0: i32, %arg1: i32) -> (i32, i32) {
    %c0_i32 = arith.constant 0 : i32
    %c0_i32_0 = arith.constant 0 : i32
    %c0_i32_1 = arith.constant 0 : i32
    return %c0_i32, %c0_i32_0 : i32, i32
  }
  func.func @transform_2(%arg0: i32, %arg1: i32) -> (i32, i32) {
    %c0_i32 = arith.constant 0 : i32
    %c0_i32_0 = arith.constant 0 : i32
    %c0_i32_1 = arith.constant 0 : i32
    return %c0_i32, %c0_i32_0 : i32, i32
  }
  func.func @transform_3(%arg0: i32, %arg1: i32) -> (i32, i32) {
    %c0_i32 = arith.constant 0 : i32
    %c0_i32_0 = arith.constant 0 : i32
    %c0_i32_1 = arith.constant 0 : i32
    return %c0_i32, %c0_i32_0 : i32, i32
  }
  func.func @transform_4(%arg0: i32, %arg1: i32) -> (i32, i32, i32) {
    %c0_i32 = arith.constant 0 : i32
    %c0_i32_0 = arith.constant 0 : i32
    return %arg0, %arg1, %c0_i32 : i32, i32, i32
  }
  func.func @transform_5(%arg0: i32, %arg1: i32) -> (i32, i32, i32) {
    %c0_i32 = arith.constant 0 : i32
    %c0_i32_0 = arith.constant 0 : i32
    return %arg0, %arg1, %c0_i32 : i32, i32, i32
  }
  func.func @transform_6(%arg0: i32, %arg1: i32) -> (i32, i32, i32) {
    %c0_i32 = arith.constant 0 : i32
    %c0_i32_0 = arith.constant 0 : i32
    return %arg0, %arg1, %c0_i32 : i32, i32, i32
  }
}

</mosaic_0001>

<llo_original>
// kernel: tpu_custom_call.1
$region0: #{tpu_custom_call.1}
  #allocation0 [shape = 'u32[]', space=smem, size = 0x4, offset = 0x4, fixed_abs, tag = 'smem constant byte address 0x4 - core index']
  #allocation1 [shape = 'u32[144,128]{1,0:T(1,128)}', space=vmem, size = 0x12000, scoped, tag = 'internal scratch']
  %s0 = inlined_call_operand.hbm [shape: f32[2,256,128], index: 0, kind: input, shape index: {}]
  %s1 = inlined_call_operand.hbm [shape: f32[128,128], index: 1, kind: input, shape index: {}]
  %s2 = inlined_call_operand.hbm [shape: f32[128,128], index: 2, kind: input, shape index: {}]
  %s3 = inlined_call_operand.hbm [shape: f32[128,128], index: 3, kind: input, shape index: {}]
  %s4 = inlined_call_operand.hbm [shape: f32[2,256,128], index: 4, kind: output, shape index: {0}]
  %s5 = inlined_call_operand.hbm [shape: f32[2,256,128], index: 5, kind: output, shape index: {1}]
  %s6 = inlined_call_operand.hbm [shape: f32[2,256,128], index: 6, kind: output, shape index: {2}]
  %7 = xla_tuple %s4, %s5, %s6
  %s8 = sld [smem:[#allocation0]]
  $region81: #{tpu_custom_call.1} parent=0
    _
  %s10 = ssub.s32 1, %s8
  %s11 = scalar_select 0, %s10, %s8
  $region1: #{tpu_custom_call.1} parent=0
    #allocation2 [shape = 'u8[131072]{0}', space=vmem, size = 0x20000, scoped, tag = 'input window, operand 0']
    #allocation3 [shape = 's32[2]{0}', space=sflag, size = 0x8, scoped, tag = 'scoped memory for tpu_custom_call.1']
    #allocation4 [shape = 's32[2]{0}', space=sflag, size = 0x8, scoped, tag = 'scoped memory for tpu_custom_call.1']
    #allocation5 [shape = 'u8[65536]{0}', space=vmem, size = 0x10000, scoped, tag = 'input window, operand 1, single buffered']
    #allocation6 [shape = 's32[1]{0}', space=sflag, size = 0x4, scoped, tag = 'scoped memory for tpu_custom_call.1']
    #allocation7 [shape = 'u8[65536]{0}', space=vmem, size = 0x10000, scoped, tag = 'input window, operand 2, single buffered']
    #allocation8 [shape = 'u8[65536]{0}', space=vmem, size = 0x10000, scoped, tag = 'input window, operand 3, single buffered']
    #allocation9 [shape = 's32[1]{0}', space=sflag, size = 0x4, scoped, tag = 'scoped memory for tpu_custom_call.1']
    #allocation10 [shape = 'u8[131072]{0}', space=vmem, size = 0x20000, scoped, tag = 'output window, operand 0']
    #allocation11 [shape = 'u8[131072]{0}', space=vmem, size = 0x20000, scoped, tag = 'output window, operand 1']
    #allocation12 [shape = 's32[2]{0}', space=sflag, size = 0x8, scoped, tag = 'scoped memory for tpu_custom_call.1']
    #allocation13 [shape = 'u8[131072]{0}', space=vmem, size = 0x20000, scoped, tag = 'output window, operand 2']
    %12 = vsyncpa [#allocation3], 0
    %s13 = scalar_lea.sflag [#allocation3], 1
    %14 = vsyncpa %s13, 0
    %15 = vsyncpa [#allocation6], 0
    %16 = vsyncpa [#allocation9], 0
    %17 = vsyncpa [#allocation4], 0
    %s18 = scalar_lea.sflag [#allocation4], 1
    %19 = vsyncpa %s18, 0
    %20 = vsyncpa [#allocation12], 0
    %s21 = scalar_lea.sflag [#allocation12], 1
    %22 = vsyncpa %s21, 0
    loop: start=0, step=1, limit=6
    $region2: #{tpu_custom_call.1} parent=1 // loop_pre_header
      _
    $region3: #{tpu_custom_call.1} parent=1 // loop_header
      %s24 = sphi 0, %s28
      %p25 = scmp.ge.s32.totalorder %s24, 6
      %s31 = sphi 0, %s43
      %s32 = sphi 0, %s39
      %s33 = sphi 0, %s31
      %s34 = sphi 0, %s32
      %s35 = sphi 0, %s33
      %s36 = sphi 0, %s34
      %s48 = sphi 0, %s50
      %s51 = sphi 0, %s48
      %s52 = sphi 0, %s51
      %s68 = sphi 0, %s52
      %s72 = sphi 0, %s72
      %s74 = sphi 0, %s72
      %s75 = sphi 0, %s74
      %s89 = sphi 0, %s75
      %s93 = sphi 0, %s93
      %s95 = sphi 0, %s93
      %s96 = sphi 0, %s95
      %s110 = sphi 0, %s96
      %s114 = sphi 0, %s114
      %s116 = sphi 0, %s114
      %s117 = sphi 0, %s116
      %s131 = sphi 0, %s117
      %s139 = sphi 0, %s141
      %s142 = sphi 0, %s139
      %s143 = sphi 0, %s142
      %s159 = sphi 0, %s143
      %s167 = sphi 0, %s169
      %s170 = sphi 0, %s167
      %s171 = sphi 0, %s170
      %s187 = sphi 0, %s171
      %s195 = sphi 0, %s197
      %s198 = sphi 0, %s195
      %s199 = sphi 0, %s198
      %s215 = sphi 0, %s199
    $region4: #{tpu_custom_call.1} parent=1 // loop_header_branch
      %27 = sbr.rel (%p25) target = $region8
    $region5: #{tpu_custom_call.1} parent=1 // loop_body
      %s29 = ssub.s32 %s24, 1
      %s30 = ssub.s32 %s24, 2
      %s37 = sadd.s32 1, %s32
      %p38 = scmp.ge.s32.totalorder %s37, 2
      %s39 = scalar_select %p38, 0, %s37
      %s40 = sadd.s32 1, %s31
      %s41 = scalar_select %p38, %s40, %s31
      %p42 = scmp.ge.s32.totalorder %s41, 2
      %s43 = scalar_select %p42, 0, %s41
      %s44 = ssub.s32 %s31, %s43
      %s45 = ssub.s32 %s32, %s39
      %s46 = sor.u32 %s44, %s45
      %p47 = scmp.eq.s32.totalorder %s46, 0
      %s49 = sadd.s32 %s48, 1
      %s50 = scalar_select %p47, %s48, %s49
      %p53 = pneg %p47
      %p54 = scmp.eq.s32.totalorder %s24, 3
      %p55 = por %p53, %p54
      %p56 = scmp.ne.s32.totalorder %s48, %s51
      %p57 = scmp.eq.s32.totalorder %s24, 0
      %p58 = por %p56, %p57
      %p59 = scmp.ne.s32.totalorder %s48, %s51
      %p60 = scmp.eq.s32.totalorder %s29, 3
      %p61 = por %p59, %p60
      %p62 = scmp.ne.s32.totalorder %s51, %s52
      %p63 = scmp.eq.s32.totalorder %s29, 0
      %p64 = por %p62, %p63
      %p65 = scmp.ne.s32.totalorder %s51, %s52
      %p66 = scmp.eq.s32.totalorder %s30, 3
      %p67 = por %p65, %p66
      %p69 = scmp.ne.s32.totalorder %s52, %s68
      %p70 = scmp.eq.s32.totalorder %s30, 0
      %p71 = por %p69, %p70
      %s73 = sadd.s32 %s72, 1
      %p76 = scmp.eq.s32.totalorder %s24, 3
      %p77 = scmp.ne.s32.totalorder %s72, %s74
      %p78 = scmp.eq.s32.totalorder %s24, 0
      %p79 = por %p77, %p78
      %p80 = scmp.ne.s32.totalorder %s72, %s74
      %p81 = scmp.eq.s32.totalorder %s29, 3
      %p82 = por %p80, %p81
      %p83 = scmp.ne.s32.totalorder %s74, %s75
      %p84 = scmp.eq.s32.totalorder %s29, 0
      %p85 = por %p83, %p84
      %p86 = scmp.ne.s32.totalorder %s74, %s75
      %p87 = scmp.eq.s32.totalorder %s30, 3
      %p88 = por %p86, %p87
      %p90 = scmp.ne.s32.totalorder %s75, %s89
      %p91 = scmp.eq.s32.totalorder %s30, 0
      %p92 = por %p90, %p91
      %s94 = sadd.s32 %s93, 1
      %p97 = scmp.eq.s32.totalorder %s24, 3
      %p98 = scmp.ne.s32.totalorder %s93, %s95
      %p99 = scmp.eq.s32.totalorder %s24, 0
      %p100 = por %p98, %p99
      %p101 = scmp.ne.s32.totalorder %s93, %s95
      %p102 = scmp.eq.s32.totalorder %s29, 3
      %p103 = por %p101, %p102
      %p104 = scmp.ne.s32.totalorder %s95, %s96
      %p105 = scmp.eq.s32.totalorder %s29, 0
      %p106 = por %p104, %p105
      %p107 = scmp.ne.s32.totalorder %s95, %s96
      %p108 = scmp.eq.s32.totalorder %s30, 3
      %p109 = por %p107, %p108
      %p111 = scmp.ne.s32.totalorder %s96, %s110
      %p112 = scmp.eq.s32.totalorder %s30, 0
      %p113 = por %p111, %p112
      %s115 = sadd.s32 %s114, 1
      %p118 = scmp.eq.s32.totalorder %s24, 3
      %p119 = scmp.ne.s32.totalorder %s114, %s116
      %p120 = scmp.eq.s32.totalorder %s24, 0
      %p121 = por %p119, %p120
      %p122 = scmp.ne.s32.totalorder %s114, %s116
      %p123 = scmp.eq.s32.totalorder %s29, 3
      %p124 = por %p122, %p123
      %p125 = scmp.ne.s32.totalorder %s116, %s117
      %p126 = scmp.eq.s32.totalorder %s29, 0
      %p127 = por %p125, %p126
      %p128 = scmp.ne.s32.totalorder %s116, %s117
      %p129 = scmp.eq.s32.totalorder %s30, 3
      %p130 = por %p128, %p129
      %p132 = scmp.ne.s32.totalorder %s117, %s131
      %p133 = scmp.eq.s32.totalorder %s30, 0
      %p134 = por %p132, %p133
      %s135 = ssub.s32 %s31, %s43
      %s136 = ssub.s32 %s32, %s39
      %s137 = sor.u32 %s135, %s136
      %p138 = scmp.eq.s32.totalorder %s137, 0
      %s140 = sadd.s32 %s139, 1
      %s141 = scalar_select %p138, %s139, %s140
      %p144 = pneg %p138
      %p145 = scmp.eq.s32.totalorder %s24, 3
      %p146 = por %p144, %p145
      %p147 = scmp.ne.s32.totalorder %s139, %s142
      %p148 = scmp.eq.s32.totalorder %s24, 0
      %p149 = por %p147, %p148
      %p150 = scmp.ne.s32.totalorder %s139, %s142
      %p151 = scmp.eq.s32.totalorder %s29, 3
      %p152 = por %p150, %p151
      %p153 = scmp.ne.s32.totalorder %s142, %s143
      %p154 = scmp.eq.s32.totalorder %s29, 0
      %p155 = por %p153, %p154
      %p156 = scmp.ne.s32.totalorder %s142, %s143
      %p157 = scmp.eq.s32.totalorder %s30, 3
      %p158 = por %p156, %p157
      %p160 = scmp.ne.s32.totalorder %s143, %s159
      %p161 = scmp.eq.s32.totalorder %s30, 0
      %p162 = por %p160, %p161
      %s163 = ssub.s32 %s31, %s43
      %s164 = ssub.s32 %s32, %s39
      %s165 = sor.u32 %s163, %s164
      %p166 = scmp.eq.s32.totalorder %s165, 0
      %s168 = sadd.s32 %s167, 1
      %s169 = scalar_select %p166, %s167, %s168
      %p172 = pneg %p166
      %p173 = scmp.eq.s32.totalorder %s24, 3
      %p174 = por %p172, %p173
      %p175 = scmp.ne.s32.totalorder %s167, %s170
      %p176 = scmp.eq.s32.totalorder %s24, 0
      %p177 = por %p175, %p176
      %p178 = scmp.ne.s32.totalorder %s167, %s170
      %p179 = scmp.eq.s32.totalorder %s29, 3
      %p180 = por %p178, %p179
      %p181 = scmp.ne.s32.totalorder %s170, %s171
      %p182 = scmp.eq.s32.totalorder %s29, 0
      %p183 = por %p181, %p182
      %p184 = scmp.ne.s32.totalorder %s170, %s171
      %p185 = scmp.eq.s32.totalorder %s30, 3
      %p186 = por %p184, %p185
      %p188 = scmp.ne.s32.totalorder %s171, %s187
      %p189 = scmp.eq.s32.totalorder %s30, 0
      %p190 = por %p188, %p189
      %s191 = ssub.s32 %s31, %s43
      %s192 = ssub.s32 %s32, %s39
      %s193 = sor.u32 %s191, %s192
      %p194 = scmp.eq.s32.totalorder %s193, 0
      %s196 = sadd.s32 %s195, 1
      %s197 = scalar_select %p194, %s195, %s196
      %p200 = pneg %p194
      %p201 = scmp.eq.s32.totalorder %s24, 3
      %p202 = por %p200, %p201
      %p203 = scmp.ne.s32.totalorder %s195, %s198
      %p204 = scmp.eq.s32.totalorder %s24, 0
      %p205 = por %p203, %p204
      %p206 = scmp.ne.s32.totalorder %s195, %s198
      %p207 = scmp.eq.s32.totalorder %s29, 3
      %p208 = por %p206, %p207
      %p209 = scmp.ne.s32.totalorder %s198, %s199
      %p210 = scmp.eq.s32.totalorder %s29, 0
      %p211 = por %p209, %p210
      %p212 = scmp.ne.s32.totalorder %s198, %s199
      %p213 = scmp.eq.s32.totalorder %s30, 3
      %p214 = por %p212, %p213
      %p216 = scmp.ne.s32.totalorder %s199, %s215
      %p217 = scmp.eq.s32.totalorder %s30, 0
      %p218 = por %p216, %p217
      %p219 = scmp.le.s32.totalorder 1, %s24
      %p220 = scmp.lt.s32.totalorder %s24, 5
      %p221 = pnand %p219, %p220
      %p222 = pneg %p221
      // Predicated region
      $region9: #{tpu_custom_call.1} parent=5 // pred_check
        _
      $region10: #{tpu_custom_call.1} parent=5 // pred_check_branch
        %224 = sbr.rel (%p221) target = $region12
      $region11: #{tpu_custom_call.1} parent=5 // pred_region
        %s225 = ssub.s32 %s24, 1
        // Predicated region
        $region13: #{tpu_custom_call.1} parent=11 // pred_check
          %p226 = pneg %p85
        $region14: #{tpu_custom_call.1} parent=11 // pred_check_branch
          %228 = sbr.rel (%p226) target = $region16
        $region15: #{tpu_custom_call.1} parent=11 // pred_region
          %s230 = ssub.s32 2048, 2048
          %231 = vsyncadd [#allocation6], %s230
          %s232 = sshll.u32 [#allocation5], 4
          %s233 = int_to_ptr.vmem [resolvable:$true] %s232
          %238 = dma.hbm_to_vmem [thread:$0]  %s1, 2048, %s233, [#allocation6], 128, 128, 8
        $region16: #{tpu_custom_call.1} parent=11 // pred_fallthru
          _
        // Predicated region
        $region17: #{tpu_custom_call.1} parent=11 // pred_check
          %p239 = pneg %p106
        $region18: #{tpu_custom_call.1} parent=11 // pred_check_branch
          %241 = sbr.rel (%p239) target = $region20
        $region19: #{tpu_custom_call.1} parent=11 // pred_region
          %s243 = ssub.s32 2048, 2048
          %244 = vsyncadd [#allocation6], %s243
          %s245 = sshll.u32 [#allocation7], 4
          %s246 = int_to_ptr.vmem [resolvable:$true] %s245
          %251 = dma.hbm_to_vmem [thread:$0]  %s2, 2048, %s246, [#allocation6], 128, 128, 8
        $region20: #{tpu_custom_call.1} parent=11 // pred_fallthru
          _
        // Predicated region
        $region21: #{tpu_custom_call.1} parent=11 // pred_check
          %p252 = pneg %p127
        $region22: #{tpu_custom_call.1} parent=11 // pred_check_branch
          %254 = sbr.rel (%p252) target = $region24
        $region23: #{tpu_custom_call.1} parent=11 // pred_region
          %s256 = ssub.s32 2048, 2048
          %257 = vsyncadd [#allocation9], %s256
          %s258 = sshll.u32 [#allocation8], 4
          %s259 = int_to_ptr.vmem [resolvable:$true] %s258
          %264 = dma.hbm_to_vmem [thread:$0]  %s3, 2048, %s259, [#allocation9], 128, 128, 8
        $region24: #{tpu_custom_call.1} parent=11 // pred_fallthru
          _
      $region12: #{tpu_custom_call.1} parent=5 // pred_fallthru
        _
      %p265 = scmp.lt.s32.totalorder %s24, 4
      // Predicated region
      $region25: #{tpu_custom_call.1} parent=5 // pred_check
        %p266 = pneg %p265
      $region26: #{tpu_custom_call.1} parent=5 // pred_check_branch
        %268 = sbr.rel (%p266) target = $region28
      $region27: #{tpu_custom_call.1} parent=5 // pred_region
        // Predicated region
        $region29: #{tpu_custom_call.1} parent=27 // pred_check
          %p269 = pneg %p58
        $region30: #{tpu_custom_call.1} parent=27 // pred_check_branch
          %271 = sbr.rel (%p269) target = $region32
        $region31: #{tpu_custom_call.1} parent=27 // pred_region
          %s272 = sand.u32 %s48, 1
          %s273 = scalar_lea.sflag [#allocation3], %s272
          %s274 = sand.u32 %s48, 1
          %s275 = smul.addr %s274, 128
          %s276 = scalar_lea.vmem [#allocation2], %s275
          %s277 = smul.u32 16, %s32
          %s279 = ssub.s32 2048, 2048
          %280 = vsyncadd %s273, %s279
          %s281 = smul.addr %s31, 32
          %s282 = sadd.s32 %s277, %s281
          %s283 = smul.addr %s282, 128
          %s284 = scalar_lea.hbm %s0, %s283
          %s285 = sshll.u32 %s276, 4
          %s286 = int_to_ptr.vmem [resolvable:$true] %s285
          %291 = dma.hbm_to_vmem [thread:$0]  %s284, 2048, %s286, %s273, 128, 128, 8
        $region32: #{tpu_custom_call.1} parent=27 // pred_fallthru
          _
      $region28: #{tpu_custom_call.1} parent=5 // pred_fallthru
        _
      %p292 = scmp.le.s32.totalorder 1, %s24
      %p293 = scmp.lt.s32.totalorder %s24, 5
      %p294 = pnand %p292, %p293
      %p295 = pneg %p294
      // Predicated region
      $region33: #{tpu_custom_call.1} parent=5 // pred_check
        _
      $region34: #{tpu_custom_call.1} parent=5 // pred_check_branch
        %297 = sbr.rel (%p294) target = $region36
      $region35: #{tpu_custom_call.1} parent=5 // pred_region
        %s298 = ssub.s32 %s24, 1
        %s299 = sand.u32 %s51, 1
        %s300 = scalar_lea.sflag [#allocation3], %s299
        %s301 = sand.u32 %s51, 1
        %s302 = smul.addr %s301, 128
        %s303 = scalar_lea.vmem [#allocation2], %s302
        // Predicated region
        $region37: #{tpu_custom_call.1} parent=35 // pred_check
          %p304 = pneg %p64
        $region38: #{tpu_custom_call.1} parent=35 // pred_check_branch
          %306 = sbr.rel (%p304) target = $region40
        $region39: #{tpu_custom_call.1} parent=35 // pred_region
          %307 = dma.done %s300, 2048
        $region40: #{tpu_custom_call.1} parent=35 // pred_fallthru
          _
        // Predicated region
        $region41: #{tpu_custom_call.1} parent=35 // pred_check
          %p308 = pneg %p85
        $region42: #{tpu_custom_call.1} parent=35 // pred_check_branch
          %310 = sbr.rel (%p308) target = $region44
        $region43: #{tpu_custom_call.1} parent=35 // pred_region
          %311 = dma.done [#allocation6], 2048
        $region44: #{tpu_custom_call.1} parent=35 // pred_fallthru
          _
        // Predicated region
        $region45: #{tpu_custom_call.1} parent=35 // pred_check
          %p312 = pneg %p106
        $region46: #{tpu_custom_call.1} parent=35 // pred_check_branch
          %314 = sbr.rel (%p312) target = $region48
        $region47: #{tpu_custom_call.1} parent=35 // pred_region
          %315 = dma.done [#allocation6], 2048
        $region48: #{tpu_custom_call.1} parent=35 // pred_fallthru
          _
        // Predicated region
        $region49: #{tpu_custom_call.1} parent=35 // pred_check
          %p316 = pneg %p127
        $region50: #{tpu_custom_call.1} parent=35 // pred_check_branch
          %318 = sbr.rel (%p316) target = $region52
        $region51: #{tpu_custom_call.1} parent=35 // pred_region
          %319 = dma.done [#allocation9], 2048
        $region52: #{tpu_custom_call.1} parent=35 // pred_fallthru
          _
        %s320 = sand.u32 %s51, 1
        %s321 = scalar_lea.sflag [#allocation3], %s320
        %s322 = sand.u32 %s51, 1
        %s323 = smul.addr %s322, 128
        %s324 = scalar_lea.vmem [#allocation2], %s323
        %p325 = pneg %p64
        %p326 = pneg %p61
        %p327 = pneg %p85
        %p328 = pneg %p82
        %p329 = pneg %p106
        %p330 = pneg %p103
        %p331 = pneg %p127
        %p332 = pneg %p124
        %p333 = pneg %p155
        %p334 = pneg %p152
        %s335 = sand.u32 %s142, 1
        %s336 = scalar_lea.sflag [#allocation4], %s335
        %s337 = sand.u32 %s142, 1
        %s338 = smul.addr %s337, 128
        %s339 = scalar_lea.vmem [#allocation10], %s338
        %p340 = pneg %p183
        %p341 = pneg %p180
        %s342 = sand.u32 %s29, 1
        %s343 = scalar_lea.sflag [#allocation12], %s342
        %s344 = sand.u32 %s170, 1
        %s345 = smul.addr %s344, 128
        %s346 = scalar_lea.vmem [#allocation11], %s345
        %p347 = pneg %p211
        %p348 = pneg %p208
        %s349 = sand.u32 %s29, 1
        %s350 = scalar_lea.sflag [#allocation12], %s349
        %s351 = sand.u32 %s198, 1
        %s352 = smul.addr %s351, 128
        %s353 = scalar_lea.vmem [#allocation13], %s352
        %s354 = smul.u32 16, %s34
        %s355 = smul.u32 16, %s34
        %s356 = smul.u32 16, %s34
        %s357 = smul.u32 16, %s34
        %v358 = vld [vmem:[%s303] sm:$0xff]
        %v359 = vld [vmem:[%s303 + $0x8] sm:$0xff]
        %v360 = vld [vmem:[%s303 + $0x10] sm:$0xff]
        %v361 = vld [vmem:[%s303 + $0x18] sm:$0xff]
        %v362 = vld [vmem:[%s303 + $0x20] sm:$0xff]
        %v363 = vld [vmem:[%s303 + $0x28] sm:$0xff]
        %v364 = vld [vmem:[%s303 + $0x30] sm:$0xff]
        %v365 = vld [vmem:[%s303 + $0x38] sm:$0xff]
        %v366 = vld [vmem:[%s303 + $0x40] sm:$0xff]
        %v367 = vld [vmem:[%s303 + $0x48] sm:$0xff]
        %v368 = vld [vmem:[%s303 + $0x50] sm:$0xff]
        %v369 = vld [vmem:[%s303 + $0x58] sm:$0xff]
        %v370 = vld [vmem:[%s303 + $0x60] sm:$0xff]
        %v371 = vld [vmem:[%s303 + $0x68] sm:$0xff]
        %v372 = vld [vmem:[%s303 + $0x70] sm:$0xff]
        %v373 = vld [vmem:[%s303 + $0x78] sm:$0xff]
        %v374 = vld [vmem:[#allocation5] sm:$0xff]
        %v375 = vld [vmem:[#allocation5 + $0x8] sm:$0xff]
        %v376 = vld [vmem:[#allocation5 + $0x10] sm:$0xff]
        %v377 = vld [vmem:[#allocation5 + $0x18] sm:$0xff]
        %v378 = vld [vmem:[#allocation5 + $0x20] sm:$0xff]
        %v379 = vld [vmem:[#allocation5 + $0x28] sm:$0xff]
        %v380 = vld [vmem:[#allocation5 + $0x30] sm:$0xff]
        %v381 = vld [vmem:[#allocation5 + $0x38] sm:$0xff]
        %v382 = vld [vmem:[#allocation5 + $0x40] sm:$0xff]
        %v383 = vld [vmem:[#allocation5 + $0x48] sm:$0xff]
        %v384 = vld [vmem:[#allocation5 + $0x50] sm:$0xff]
        %v385 = vld [vmem:[#allocation5 + $0x58] sm:$0xff]
        %v386 = vld [vmem:[#allocation5 + $0x60] sm:$0xff]
        %v387 = vld [vmem:[#allocation5 + $0x68] sm:$0xff]
        %v388 = vld [vmem:[#allocation5 + $0x70] sm:$0xff]
        %v389 = vld [vmem:[#allocation5 + $0x78] sm:$0xff]
        %390 = vmatprep.subr.mxu0 0.0
        %391 = vmatpush1.msra.mxu0 %v374
        %392 = vmatprep.subr.mxu0 0.0
        %393 = vmatpush1.msra.mxu0 %v375
        %394 = vmatprep.subr.mxu0 0.0
        %395 = vmatpush1.msra.mxu0 %v376
        %396 = vmatprep.subr.mxu0 0.0
        %397 = vmatpush1.msra.mxu0 %v377
        %398 = vmatprep.subr.mxu0 0.0
        %399 = vmatpush1.msra.mxu0 %v378
        %400 = vmatprep.subr.mxu0 0.0
        %401 = vmatpush1.msra.mxu0 %v379
        %402 = vmatprep.subr.mxu0 0.0
        %403 = vmatpush1.msra.mxu0 %v380
        %404 = vmatprep.subr.mxu0 0.0
        %405 = vmatpush1.msra.mxu0 %v381
        %406 = vmatprep.subr.mxu0 0.0
        %407 = vmatpush1.msra.mxu0 %v382
        %408 = vmatprep.subr.mxu0 0.0
        %409 = vmatpush1.msra.mxu0 %v383
        %410 = vmatprep.subr.mxu0 0.0
        %411 = vmatpush1.msra.mxu0 %v384
        %412 = vmatprep.subr.mxu0 0.0
        %413 = vmatpush1.msra.mxu0 %v385
        %414 = vmatprep.subr.mxu0 0.0
        %415 = vmatpush1.msra.mxu0 %v386
        %416 = vmatprep.subr.mxu0 0.0
        %417 = vmatpush1.msra.mxu0 %v387
        %418 = vmatprep.subr.mxu0 0.0
        %419 = vmatpush1.msra.mxu0 %v388
        %420 = vmatprep.subr.mxu0 0.0
        %421 = vmatpush1.msra.mxu0 %v389
        %422 = vmatprep.subr.mxu0 0.0
        %423 = vmatpush1.msra.mxu0 0.0
        %424 = vmatprep.subr.mxu0 0.0
        %425 = vmatpush1.msra.mxu0 0.0
        %426 = vmatprep.subr.mxu0 0.0
        %427 = vmatpush1.msra.mxu0 0.0
        %428 = vmatprep.subr.mxu0 0.0
        %429 = vmatpush1.msra.mxu0 0.0
        %430 = vmatprep.subr.mxu0 0.0
        %431 = vmatpush1.msra.mxu0 0.0
        %432 = vmatprep.subr.mxu0 0.0
        %433 = vmatpush1.msra.mxu0 0.0
        %434 = vmatprep.subr.mxu0 0.0
        %435 = vmatpush1.msra.mxu0 0.0
        %436 = vmatprep.subr.mxu0 0.0
        %437 = vmatpush1.msra.mxu0 0.0
        %438 = vmatprep.subr.mxu0 0.0
        %439 = vmatpush1.msra.mxu0 0.0
        %440 = vmatprep.subr.mxu0 0.0
        %441 = vmatpush1.msra.mxu0 0.0
        %442 = vmatprep.subr.mxu0 0.0
        %443 = vmatpush1.msra.mxu0 0.0
        %444 = vmatprep.subr.mxu0 0.0
        %445 = vmatpush1.msra.mxu0 0.0
        %446 = vmatprep.subr.mxu0 0.0
        %447 = vmatpush1.msra.mxu0 0.0
        %448 = vmatprep.subr.mxu0 0.0
        %449 = vmatpush1.msra.mxu0 0.0
        %450 = vmatprep.subr.mxu0 0.0
        %451 = vmatpush1.msra.mxu0 0.0
        %452 = vmatprep.subr.mxu0 0.0
        %453 = vmatpush1.msra.mxu0 0.0
        %454 = vmatprep.mubr.f32.mxu0 0.0
        %455 = vmatmul.mubr.f32.gmra.mrb[0].mxu0 %v358
        %v456 = vpop.f32.mrb[0].mxu0
        %v457 = vadd.f32 0.0, %v456
        %v458 = vpop.f32.mrb[0].mxu0
        %459 = vmatprep.mubr.f32.mxu0 0.0
        %460 = vmatmul.mubr.f32.gmra.mrb[0].mxu0 %v359
        %v461 = vpop.f32.mrb[0].mxu0
        %v462 = vadd.f32 0.0, %v461
        %v463 = vpop.f32.mrb[0].mxu0
        %464 = vmatprep.mubr.f32.mxu0 0.0
        %465 = vmatmul.mubr.f32.gmra.mrb[0].mxu0 %v360
        %v466 = vpop.f32.mrb[0].mxu0
        %v467 = vadd.f32 0.0, %v466
        %v468 = vpop.f32.mrb[0].mxu0
        %469 = vmatprep.mubr.f32.mxu0 0.0
        %470 = vmatmul.mubr.f32.gmra.mrb[0].mxu0 %v361
        %v471 = vpop.f32.mrb[0].mxu0
        %v472 = vadd.f32 0.0, %v471
        %v473 = vpop.f32.mrb[0].mxu0
        %474 = vmatprep.mubr.f32.mxu0 0.0
        %475 = vmatmul.mubr.f32.gmra.mrb[0].mxu0 %v362
        %v476 = vpop.f32.mrb[0].mxu0
        %v477 = vadd.f32 0.0, %v476
        %v478 = vpop.f32.mrb[0].mxu0
        %479 = vmatprep.mubr.f32.mxu0 0.0
        %480 = vmatmul.mubr.f32.gmra.mrb[0].mxu0 %v363
        %v481 = vpop.f32.mrb[0].mxu0
        %v482 = vadd.f32 0.0, %v481
        %v483 = vpop.f32.mrb[0].mxu0
        %484 = vmatprep.mubr.f32.mxu0 0.0
        %485 = vmatmul.mubr.f32.gmra.mrb[0].mxu0 %v364
        %v486 = vpop.f32.mrb[0].mxu0
        %v487 = vadd.f32 0.0, %v486
        %v488 = vpop.f32.mrb[0].mxu0
        %489 = vmatprep.mubr.f32.mxu0 0.0
        %490 = vmatmul.mubr.f32.gmra.mrb[0].mxu0 %v365
        %v491 = vpop.f32.mrb[0].mxu0
        %v492 = vadd.f32 0.0, %v491
        %v493 = vpop.f32.mrb[0].mxu0
        %494 = vmatprep.mubr.f32.mxu0 0.0
        %495 = vmatmul.mubr.f32.gmra.mrb[0].mxu0 %v366
        %v496 = vpop.f32.mrb[0].mxu0
        %v497 = vadd.f32 0.0, %v496
        %v498 = vpop.f32.mrb[0].mxu0
        %499 = vmatprep.mubr.f32.mxu0 0.0
        %500 = vmatmul.mubr.f32.gmra.mrb[0].mxu0 %v367
        %v501 = vpop.f32.mrb[0].mxu0
        %v502 = vadd.f32 0.0, %v501
        %v503 = vpop.f32.mrb[0].mxu0
        %504 = vmatprep.mubr.f32.mxu0 0.0
        %505 = vmatmul.mubr.f32.gmra.mrb[0].mxu0 %v368
        %v506 = vpop.f32.mrb[0].mxu0
        %v507 = vadd.f32 0.0, %v506
        %v508 = vpop.f32.mrb[0].mxu0
        %509 = vmatprep.mubr.f32.mxu0 0.0
        %510 = vmatmul.mubr.f32.gmra.mrb[0].mxu0 %v369
        %v511 = vpop.f32.mrb[0].mxu0
        %v512 = vadd.f32 0.0, %v511
        %v513 = vpop.f32.mrb[0].mxu0
        %514 = vmatprep.mubr.f32.mxu0 0.0
        %515 = vmatmul.mubr.f32.gmra.mrb[0].mxu0 %v370
        %v516 = vpop.f32.mrb[0].mxu0
        %v517 = vadd.f32 0.0, %v516
        %v518 = vpop.f32.mrb[0].mxu0
        %519 = vmatprep.mubr.f32.mxu0 0.0
        %520 = vmatmul.mubr.f32.gmra.mrb[0].mxu0 %v371
        %v521 = vpop.f32.mrb[0].mxu0
        %v522 = vadd.f32 0.0, %v521
        %v523 = vpop.f32.mrb[0].mxu0
        %524 = vmatprep.mubr.f32.mxu0 0.0
        %525 = vmatmul.mubr.f32.gmra.mrb[0].mxu0 %v372
        %v526 = vpop.f32.mrb[0].mxu0
        %v527 = vadd.f32 0.0, %v526
        %v528 = vpop.f32.mrb[0].mxu0
        %529 = vmatprep.mubr.f32.mxu0 0.0
        %530 = vmatmul.mubr.f32.gmra.mrb[0].mxu0 %v373
        %v531 = vpop.f32.mrb[0].mxu0
        %v532 = vadd.f32 0.0, %v531
        %v533 = vpop.f32.mrb[0].mxu0
        %534 = vdwg.mxu0
        %535 = vst [vmem:[%s339] sm:$0xff] %v457
        %536 = vst [vmem:[%s339 + $0x8] sm:$0xff] %v462
        %537 = vst [vmem:[%s339 + $0x10] sm:$0xff] %v467
        %538 = vst [vmem:[%s339 + $0x18] sm:$0xff] %v472
        %539 = vst [vmem:[%s339 + $0x20] sm:$0xff] %v477
        %540 = vst [vmem:[%s339 + $0x28] sm:$0xff] %v482
        %541 = vst [vmem:[%s339 + $0x30] sm:$0xff] %v487
        %542 = vst [vmem:[%s339 + $0x38] sm:$0xff] %v492
        %543 = vst [vmem:[%s339 + $0x40] sm:$0xff] %v497
        %544 = vst [vmem:[%s339 + $0x48] sm:$0xff] %v502
        %545 = vst [vmem:[%s339 + $0x50] sm:$0xff] %v507
        %546 = vst [vmem:[%s339 + $0x58] sm:$0xff] %v512
        %547 = vst [vmem:[%s339 + $0x60] sm:$0xff] %v517
        %548 = vst [vmem:[%s339 + $0x68] sm:$0xff] %v522
        %549 = vst [vmem:[%s339 + $0x70] sm:$0xff] %v527
        %550 = vst [vmem:[%s339 + $0x78] sm:$0xff] %v532
        %v551 = vld [vmem:[#allocation7] sm:$0xff]
        %v552 = vld [vmem:[#allocation7 + $0x8] sm:$0xff]
        %v553 = vld [vmem:[#allocation7 + $0x10] sm:$0xff]
        %v554 = vld [vmem:[#allocation7 + $0x18] sm:$0xff]
        %v555 = vld [vmem:[#allocation7 + $0x20] sm:$0xff]
        %v556 = vld [vmem:[#allocation7 + $0x28] sm:$0xff]
        %v557 = vld [vmem:[#allocation7 + $0x30] sm:$0xff]
        %v558 = vld [vmem:[#allocation7 + $0x38] sm:$0xff]
        %v559 = vld [vmem:[#allocation7 + $0x40] sm:$0xff]
        %v560 = vld [vmem:[#allocation7 + $0x48] sm:$0xff]
        %v561 = vld [vmem:[#allocation7 + $0x50] sm:$0xff]
        %v562 = vld [vmem:[#allocation7 + $0x58] sm:$0xff]
        %v563 = vld [vmem:[#allocation7 + $0x60] sm:$0xff]
        %v564 = vld [vmem:[#allocation7 + $0x68] sm:$0xff]
        %v565 = vld [vmem:[#allocation7 + $0x70] sm:$0xff]
        %v566 = vld [vmem:[#allocation7 + $0x78] sm:$0xff]
        %567 = vmatprep.subr.mxu0 0.0
        %568 = vmatpush1.msra.mxu0 %v551
        %569 = vmatprep.subr.mxu0 0.0
        %570 = vmatpush1.msra.mxu0 %v552
        %571 = vmatprep.subr.mxu0 0.0
        %572 = vmatpush1.msra.mxu0 %v553
        %573 = vmatprep.subr.mxu0 0.0
        %574 = vmatpush1.msra.mxu0 %v554
        %575 = vmatprep.subr.mxu0 0.0
        %576 = vmatpush1.msra.mxu0 %v555
        %577 = vmatprep.subr.mxu0 0.0
        %578 = vmatpush1.msra.mxu0 %v556
        %579 = vmatprep.subr.mxu0 0.0
        %580 = vmatpush1.msra.mxu0 %v557
        %581 = vmatprep.subr.mxu0 0.0
        %582 = vmatpush1.msra.mxu0 %v558
        %583 = vmatprep.subr.mxu0 0.0
        %584 = vmatpush1.msra.mxu0 %v559
        %585 = vmatprep.subr.mxu0 0.0
        %586 = vmatpush1.msra.mxu0 %v560
        %587 = vmatprep.subr.mxu0 0.0
        %588 = vmatpush1.msra.mxu0 %v561
        %589 = vmatprep.subr.mxu0 0.0
        %590 = vmatpush1.msra.mxu0 %v562
        %591 = vmatprep.subr.mxu0 0.0
        %592 = vmatpush1.msra.mxu0 %v563
        %593 = vmatprep.subr.mxu0 0.0
        %594 = vmatpush1.msra.mxu0 %v564
        %595 = vmatprep.subr.mxu0 0.0
        %596 = vmatpush1.msra.mxu0 %v565
        %597 = vmatprep.subr.mxu0 0.0
        %598 = vmatpush1.msra.mxu0 %v566
        %599 = vmatprep.subr.mxu0 0.0
        %600 = vmatpush1.msra.mxu0 0.0
        %601 = vmatprep.subr.mxu0 0.0
        %602 = vmatpush1.msra.mxu0 0.0
        %603 = vmatprep.subr.mxu0 0.0
        %604 = vmatpush1.msra.mxu0 0.0
        %605 = vmatprep.subr.mxu0 0.0
        %606 = vmatpush1.msra.mxu0 0.0
        %607 = vmatprep.subr.mxu0 0.0
        %608 = vmatpush1.msra.mxu0 0.0
        %609 = vmatprep.subr.mxu0 0.0
        %610 = vmatpush1.msra.mxu0 0.0
        %611 = vmatprep.subr.mxu0 0.0
        %612 = vmatpush1.msra.mxu0 0.0
        %613 = vmatprep.subr.mxu0 0.0
        %614 = vmatpush1.msra.mxu0 0.0
        %615 = vmatprep.subr.mxu0 0.0
        %616 = vmatpush1.msra.mxu0 0.0
        %617 = vmatprep.subr.mxu0 0.0
        %618 = vmatpush1.msra.mxu0 0.0
        %619 = vmatprep.subr.mxu0 0.0
        %620 = vmatpush1.msra.mxu0 0.0
        %621 = vmatprep.subr.mxu0 0.0
        %622 = vmatpush1.msra.mxu0 0.0
        %623 = vmatprep.subr.mxu0 0.0
        %624 = vmatpush1.msra.mxu0 0.0
        %625 = vmatprep.subr.mxu0 0.0
        %626 = vmatpush1.msra.mxu0 0.0
        %627 = vmatprep.subr.mxu0 0.0
        %628 = vmatpush1.msra.mxu0 0.0
        %629 = vmatprep.subr.mxu0 0.0
        %630 = vmatpush1.msra.mxu0 0.0
        %631 = vmatprep.mubr.f32.mxu0 0.0
        %632 = vmatmul.mubr.f32.gmra.mrb[0].mxu0 %v358
        %v633 = vpop.f32.mrb[0].mxu0
        %v634 = vadd.f32 0.0, %v633
        %v635 = vpop.f32.mrb[0].mxu0
        %636 = vmatprep.mubr.f32.mxu0 0.0
        %637 = vmatmul.mubr.f32.gmra.mrb[0].mxu0 %v359
        %v638 = vpop.f32.mrb[0].mxu0
        %v639 = vadd.f32 0.0, %v638
        %v640 = vpop.f32.mrb[0].mxu0
        %641 = vmatprep.mubr.f32.mxu0 0.0
        %642 = vmatmul.mubr.f32.gmra.mrb[0].mxu0 %v360
        %v643 = vpop.f32.mrb[0].mxu0
        %v644 = vadd.f32 0.0, %v643
        %v645 = vpop.f32.mrb[0].mxu0
        %646 = vmatprep.mubr.f32.mxu0 0.0
        %647 = vmatmul.mubr.f32.gmra.mrb[0].mxu0 %v361
        %v648 = vpop.f32.mrb[0].mxu0
        %v649 = vadd.f32 0.0, %v648
        %v650 = vpop.f32.mrb[0].mxu0
        %651 = vmatprep.mubr.f32.mxu0 0.0
        %652 = vmatmul.mubr.f32.gmra.mrb[0].mxu0 %v362
        %v653 = vpop.f32.mrb[0].mxu0
        %v654 = vadd.f32 0.0, %v653
        %v655 = vpop.f32.mrb[0].mxu0
        %656 = vmatprep.mubr.f32.mxu0 0.0
        %657 = vmatmul.mubr.f32.gmra.mrb[0].mxu0 %v363
        %v658 = vpop.f32.mrb[0].mxu0
        %v659 = vadd.f32 0.0, %v658
        %v660 = vpop.f32.mrb[0].mxu0
        %661 = vmatprep.mubr.f32.mxu0 0.0
        %662 = vmatmul.mubr.f32.gmra.mrb[0].mxu0 %v364
        %v663 = vpop.f32.mrb[0].mxu0
        %v664 = vadd.f32 0.0, %v663
        %v665 = vpop.f32.mrb[0].mxu0
        %666 = vmatprep.mubr.f32.mxu0 0.0
        %667 = vmatmul.mubr.f32.gmra.mrb[0].mxu0 %v365
        %v668 = vpop.f32.mrb[0].mxu0
        %v669 = vadd.f32 0.0, %v668
        %v670 = vpop.f32.mrb[0].mxu0
        %671 = vmatprep.mubr.f32.mxu0 0.0
        %672 = vmatmul.mubr.f32.gmra.mrb[0].mxu0 %v366
        %v673 = vpop.f32.mrb[0].mxu0
        %v674 = vadd.f32 0.0, %v673
        %v675 = vpop.f32.mrb[0].mxu0
        %676 = vmatprep.mubr.f32.mxu0 0.0
        %677 = vmatmul.mubr.f32.gmra.mrb[0].mxu0 %v367
        %v678 = vpop.f32.mrb[0].mxu0
        %v679 = vadd.f32 0.0, %v678
        %v680 = vpop.f32.mrb[0].mxu0
        %681 = vmatprep.mubr.f32.mxu0 0.0
        %682 = vmatmul.mubr.f32.gmra.mrb[0].mxu0 %v368
        %v683 = vpop.f32.mrb[0].mxu0
        %v684 = vadd.f32 0.0, %v683
        %v685 = vpop.f32.mrb[0].mxu0
        %686 = vmatprep.mubr.f32.mxu0 0.0
        %687 = vmatmul.mubr.f32.gmra.mrb[0].mxu0 %v369
        %v688 = vpop.f32.mrb[0].mxu0
        %v689 = vadd.f32 0.0, %v688
        %v690 = vpop.f32.mrb[0].mxu0
        %691 = vmatprep.mubr.f32.mxu0 0.0
        %692 = vmatmul.mubr.f32.gmra.mrb[0].mxu0 %v370
        %v693 = vpop.f32.mrb[0].mxu0
        %v694 = vadd.f32 0.0, %v693
        %v695 = vpop.f32.mrb[0].mxu0
        %696 = vmatprep.mubr.f32.mxu0 0.0
        %697 = vmatmul.mubr.f32.gmra.mrb[0].mxu0 %v371
        %v698 = vpop.f32.mrb[0].mxu0
        %v699 = vadd.f32 0.0, %v698
        %v700 = vpop.f32.mrb[0].mxu0
        %701 = vmatprep.mubr.f32.mxu0 0.0
        %702 = vmatmul.mubr.f32.gmra.mrb[0].mxu0 %v372
        %v703 = vpop.f32.mrb[0].mxu0
        %v704 = vadd.f32 0.0, %v703
        %v705 = vpop.f32.mrb[0].mxu0
        %706 = vmatprep.mubr.f32.mxu0 0.0
        %707 = vmatmul.mubr.f32.gmra.mrb[0].mxu0 %v373
        %v708 = vpop.f32.mrb[0].mxu0
        %v709 = vadd.f32 0.0, %v708
        %v710 = vpop.f32.mrb[0].mxu0
        %711 = vdwg.mxu0
        %712 = vst [vmem:[%s346] sm:$0xff] %v634
        %713 = vst [vmem:[%s346 + $0x8] sm:$0xff] %v639
        %714 = vst [vmem:[%s346 + $0x10] sm:$0xff] %v644
        %715 = vst [vmem:[%s346 + $0x18] sm:$0xff] %v649
        %716 = vst [vmem:[%s346 + $0x20] sm:$0xff] %v654
        %717 = vst [vmem:[%s346 + $0x28] sm:$0xff] %v659
        %718 = vst [vmem:[%s346 + $0x30] sm:$0xff] %v664
        %719 = vst [vmem:[%s346 + $0x38] sm:$0xff] %v669
        %720 = vst [vmem:[%s346 + $0x40] sm:$0xff] %v674
        %721 = vst [vmem:[%s346 + $0x48] sm:$0xff] %v679
        %722 = vst [vmem:[%s346 + $0x50] sm:$0xff] %v684
        %723 = vst [vmem:[%s346 + $0x58] sm:$0xff] %v689
        %724 = vst [vmem:[%s346 + $0x60] sm:$0xff] %v694
        %725 = vst [vmem:[%s346 + $0x68] sm:$0xff] %v699
        %726 = vst [vmem:[%s346 + $0x70] sm:$0xff] %v704
        %727 = vst [vmem:[%s346 + $0x78] sm:$0xff] %v709
        %v728 = vld [vmem:[#allocation8] sm:$0xff]
        %v729 = vld [vmem:[#allocation8 + $0x8] sm:$0xff]
        %v730 = vld [vmem:[#allocation8 + $0x10] sm:$0xff]
        %v731 = vld [vmem:[#allocation8 + $0x18] sm:$0xff]
        %v732 = vld [vmem:[#allocation8 + $0x20] sm:$0xff]
        %v733 = vld [vmem:[#allocation8 + $0x28] sm:$0xff]
        %v734 = vld [vmem:[#allocation8 + $0x30] sm:$0xff]
        %v735 = vld [vmem:[#allocation8 + $0x38] sm:$0xff]
        %v736 = vld [vmem:[#allocation8 + $0x40] sm:$0xff]
        %v737 = vld [vmem:[#allocation8 + $0x48] sm:$0xff]
        %v738 = vld [vmem:[#allocation8 + $0x50] sm:$0xff]
        %v739 = vld [vmem:[#allocation8 + $0x58] sm:$0xff]
        %v740 = vld [vmem:[#allocation8 + $0x60] sm:$0xff]
        %v741 = vld [vmem:[#allocation8 + $0x68] sm:$0xff]
        %v742 = vld [vmem:[#allocation8 + $0x70] sm:$0xff]
        %v743 = vld [vmem:[#allocation8 + $0x78] sm:$0xff]
        %744 = vmatprep.subr.mxu0 0.0
        %745 = vmatpush1.msra.mxu0 %v728
        %746 = vmatprep.subr.mxu0 0.0
        %747 = vmatpush1.msra.mxu0 %v729
        %748 = vmatprep.subr.mxu0 0.0
        %749 = vmatpush1.msra.mxu0 %v730
        %750 = vmatprep.subr.mxu0 0.0
        %751 = vmatpush1.msra.mxu0 %v731
        %752 = vmatprep.subr.mxu0 0.0
        %753 = vmatpush1.msra.mxu0 %v732
        %754 = vmatprep.subr.mxu0 0.0
        %755 = vmatpush1.msra.mxu0 %v733
        %756 = vmatprep.subr.mxu0 0.0
        %757 = vmatpush1.msra.mxu0 %v734
        %758 = vmatprep.subr.mxu0 0.0
        %759 = vmatpush1.msra.mxu0 %v735
        %760 = vmatprep.subr.mxu0 0.0
        %761 = vmatpush1.msra.mxu0 %v736
        %762 = vmatprep.subr.mxu0 0.0
        %763 = vmatpush1.msra.mxu0 %v737
        %764 = vmatprep.subr.mxu0 0.0
        %765 = vmatpush1.msra.mxu0 %v738
        %766 = vmatprep.subr.mxu0 0.0
        %767 = vmatpush1.msra.mxu0 %v739
        %768 = vmatprep.subr.mxu0 0.0
        %769 = vmatpush1.msra.mxu0 %v740
        %770 = vmatprep.subr.mxu0 0.0
        %771 = vmatpush1.msra.mxu0 %v741
        %772 = vmatprep.subr.mxu0 0.0
        %773 = vmatpush1.msra.mxu0 %v742
        %774 = vmatprep.subr.mxu0 0.0
        %775 = vmatpush1.msra.mxu0 %v743
        %776 = vmatprep.subr.mxu0 0.0
        %777 = vmatpush1.msra.mxu0 0.0
        %778 = vmatprep.subr.mxu0 0.0
        %779 = vmatpush1.msra.mxu0 0.0
        %780 = vmatprep.subr.mxu0 0.0
        %781 = vmatpush1.msra.mxu0 0.0
        %782 = vmatprep.subr.mxu0 0.0
        %783 = vmatpush1.msra.mxu0 0.0
        %784 = vmatprep.subr.mxu0 0.0
        %785 = vmatpush1.msra.mxu0 0.0
        %786 = vmatprep.subr.mxu0 0.0
        %787 = vmatpush1.msra.mxu0 0.0
        %788 = vmatprep.subr.mxu0 0.0
        %789 = vmatpush1.msra.mxu0 0.0
        %790 = vmatprep.subr.mxu0 0.0
        %791 = vmatpush1.msra.mxu0 0.0
        %792 = vmatprep.subr.mxu0 0.0
        %793 = vmatpush1.msra.mxu0 0.0
        %794 = vmatprep.subr.mxu0 0.0
        %795 = vmatpush1.msra.mxu0 0.0
        %796 = vmatprep.subr.mxu0 0.0
        %797 = vmatpush1.msra.mxu0 0.0
        %798 = vmatprep.subr.mxu0 0.0
        %799 = vmatpush1.msra.mxu0 0.0
        %800 = vmatprep.subr.mxu0 0.0
        %801 = vmatpush1.msra.mxu0 0.0
        %802 = vmatprep.subr.mxu0 0.0
        %803 = vmatpush1.msra.mxu0 0.0
        %804 = vmatprep.subr.mxu0 0.0
        %805 = vmatpush1.msra.mxu0 0.0
        %806 = vmatprep.subr.mxu0 0.0
        %807 = vmatpush1.msra.mxu0 0.0
        %808 = vmatprep.mubr.f32.mxu0 0.0
        %809 = vmatmul.mubr.f32.gmra.mrb[0].mxu0 %v358
        %v810 = vpop.f32.mrb[0].mxu0
        %v811 = vadd.f32 0.0, %v810
        %v812 = vpop.f32.mrb[0].mxu0
        %813 = vmatprep.mubr.f32.mxu0 0.0
        %814 = vmatmul.mubr.f32.gmra.mrb[0].mxu0 %v359
        %v815 = vpop.f32.mrb[0].mxu0
        %v816 = vadd.f32 0.0, %v815
        %v817 = vpop.f32.mrb[0].mxu0
        %818 = vmatprep.mubr.f32.mxu0 0.0
        %819 = vmatmul.mubr.f32.gmra.mrb[0].mxu0 %v360
        %v820 = vpop.f32.mrb[0].mxu0
        %v821 = vadd.f32 0.0, %v820
        %v822 = vpop.f32.mrb[0].mxu0
        %823 = vmatprep.mubr.f32.mxu0 0.0
        %824 = vmatmul.mubr.f32.gmra.mrb[0].mxu0 %v361
        %v825 = vpop.f32.mrb[0].mxu0
        %v826 = vadd.f32 0.0, %v825
        %v827 = vpop.f32.mrb[0].mxu0
        %828 = vmatprep.mubr.f32.mxu0 0.0
        %829 = vmatmul.mubr.f32.gmra.mrb[0].mxu0 %v362
        %v830 = vpop.f32.mrb[0].mxu0
        %v831 = vadd.f32 0.0, %v830
        %v832 = vpop.f32.mrb[0].mxu0
        %833 = vmatprep.mubr.f32.mxu0 0.0
        %834 = vmatmul.mubr.f32.gmra.mrb[0].mxu0 %v363
        %v835 = vpop.f32.mrb[0].mxu0
        %v836 = vadd.f32 0.0, %v835
        %v837 = vpop.f32.mrb[0].mxu0
        %838 = vmatprep.mubr.f32.mxu0 0.0
        %839 = vmatmul.mubr.f32.gmra.mrb[0].mxu0 %v364
        %v840 = vpop.f32.mrb[0].mxu0
        %v841 = vadd.f32 0.0, %v840
        %v842 = vpop.f32.mrb[0].mxu0
        %843 = vmatprep.mubr.f32.mxu0 0.0
        %844 = vmatmul.mubr.f32.gmra.mrb[0].mxu0 %v365
        %v845 = vpop.f32.mrb[0].mxu0
        %v846 = vadd.f32 0.0, %v845
        %v847 = vpop.f32.mrb[0].mxu0
        %848 = vmatprep.mubr.f32.mxu0 0.0
        %849 = vmatmul.mubr.f32.gmra.mrb[0].mxu0 %v366
        %v850 = vpop.f32.mrb[0].mxu0
        %v851 = vadd.f32 0.0, %v850
        %v852 = vpop.f32.mrb[0].mxu0
        %853 = vmatprep.mubr.f32.mxu0 0.0
        %854 = vmatmul.mubr.f32.gmra.mrb[0].mxu0 %v367
        %v855 = vpop.f32.mrb[0].mxu0
        %v856 = vadd.f32 0.0, %v855
        %v857 = vpop.f32.mrb[0].mxu0
        %858 = vmatprep.mubr.f32.mxu0 0.0
        %859 = vmatmul.mubr.f32.gmra.mrb[0].mxu0 %v368
        %v860 = vpop.f32.mrb[0].mxu0
        %v861 = vadd.f32 0.0, %v860
        %v862 = vpop.f32.mrb[0].mxu0
        %863 = vmatprep.mubr.f32.mxu0 0.0
        %864 = vmatmul.mubr.f32.gmra.mrb[0].mxu0 %v369
        %v865 = vpop.f32.mrb[0].mxu0
        %v866 = vadd.f32 0.0, %v865
        %v867 = vpop.f32.mrb[0].mxu0
        %868 = vmatprep.mubr.f32.mxu0 0.0
        %869 = vmatmul.mubr.f32.gmra.mrb[0].mxu0 %v370
        %v870 = vpop.f32.mrb[0].mxu0
        %v871 = vadd.f32 0.0, %v870
        %v872 = vpop.f32.mrb[0].mxu0
        %873 = vmatprep.mubr.f32.mxu0 0.0
        %874 = vmatmul.mubr.f32.gmra.mrb[0].mxu0 %v371
        %v875 = vpop.f32.mrb[0].mxu0
        %v876 = vadd.f32 0.0, %v875
        %v877 = vpop.f32.mrb[0].mxu0
        %878 = vmatprep.mubr.f32.mxu0 0.0
        %879 = vmatmul.mubr.f32.gmra.mrb[0].mxu0 %v372
        %v880 = vpop.f32.mrb[0].mxu0
        %v881 = vadd.f32 0.0, %v880
        %v882 = vpop.f32.mrb[0].mxu0
        %883 = vmatprep.mubr.f32.mxu0 0.0
        %884 = vmatmul.mubr.f32.gmra.mrb[0].mxu0 %v373
        %v885 = vpop.f32.mrb[0].mxu0
        %v886 = vadd.f32 0.0, %v885
        %v887 = vpop.f32.mrb[0].mxu0
        %888 = vdwg.mxu0
        %889 = vst [vmem:[%s353] sm:$0xff] %v811
        %890 = vst [vmem:[%s353 + $0x8] sm:$0xff] %v816
        %891 = vst [vmem:[%s353 + $0x10] sm:$0xff] %v821
        %892 = vst [vmem:[%s353 + $0x18] sm:$0xff] %v826
        %893 = vst [vmem:[%s353 + $0x20] sm:$0xff] %v831
        %894 = vst [vmem:[%s353 + $0x28] sm:$0xff] %v836
        %895 = vst [vmem:[%s353 + $0x30] sm:$0xff] %v841
        %896 = vst [vmem:[%s353 + $0x38] sm:$0xff] %v846
        %897 = vst [vmem:[%s353 + $0x40] sm:$0xff] %v851
        %898 = vst [vmem:[%s353 + $0x48] sm:$0xff] %v856
        %899 = vst [vmem:[%s353 + $0x50] sm:$0xff] %v861
        %900 = vst [vmem:[%s353 + $0x58] sm:$0xff] %v866
        %901 = vst [vmem:[%s353 + $0x60] sm:$0xff] %v871
        %902 = vst [vmem:[%s353 + $0x68] sm:$0xff] %v876
        %903 = vst [vmem:[%s353 + $0x70] sm:$0xff] %v881
        %904 = vst [vmem:[%s353 + $0x78] sm:$0xff] %v886
        %s905 = sand.u32 %s142, 1
        %s906 = scalar_lea.sflag [#allocation4], %s905
        %s907 = sand.u32 %s142, 1
        %s908 = smul.addr %s907, 128
        %s909 = scalar_lea.vmem [#allocation10], %s908
        %s910 = sand.u32 %s29, 1
        %s911 = scalar_lea.sflag [#allocation12], %s910
        %s912 = sand.u32 %s170, 1
        %s913 = smul.addr %s912, 128
        %s914 = scalar_lea.vmem [#allocation11], %s913
        %s915 = sand.u32 %s29, 1
        %s916 = scalar_lea.sflag [#allocation12], %s915
        %s917 = sand.u32 %s198, 1
        %s918 = smul.addr %s917, 128
        %s919 = scalar_lea.vmem [#allocation13], %s918
        // Predicated region
        $region53: #{tpu_custom_call.1} parent=35 // pred_check
          %p920 = pneg %p152
        $region54: #{tpu_custom_call.1} parent=35 // pred_check_branch
          %922 = sbr.rel (%p920) target = $region56
        $region55: #{tpu_custom_call.1} parent=35 // pred_region
          %s923 = smul.u32 16, %s34
          %s925 = ssub.s32 2048, 2048
          %926 = vsyncadd %s906, %s925
          %s927 = smul.addr %s33, 32
          %s928 = sadd.s32 %s923, %s927
          %s929 = smul.addr %s928, 128
          %s930 = scalar_lea.hbm %s4, %s929
          %s931 = sshll.u32 %s909, 4
          %s932 = int_to_ptr.vmem [resolvable:$true] %s931
          %937 = dma.vmem_to_hbm [thread:$0]  %s932, 2048, %s930, %s906, 128, 128, 8
        $region56: #{tpu_custom_call.1} parent=35 // pred_fallthru
          _
        // Predicated region
        $region57: #{tpu_custom_call.1} parent=35 // pred_check
          %p938 = pneg %p180
        $region58: #{tpu_custom_call.1} parent=35 // pred_check_branch
          %940 = sbr.rel (%p938) target = $region60
        $region59: #{tpu_custom_call.1} parent=35 // pred_region
          %s941 = smul.u32 16, %s34
          %s943 = ssub.s32 2048, 2048
          %944 = vsyncadd %s911, %s943
          %s945 = smul.addr %s33, 32
          %s946 = sadd.s32 %s941, %s945
          %s947 = smul.addr %s946, 128
          %s948 = scalar_lea.hbm %s5, %s947
          %s949 = sshll.u32 %s914, 4
          %s950 = int_to_ptr.vmem [resolvable:$true] %s949
          %955 = dma.vmem_to_hbm [thread:$0]  %s950, 2048, %s948, %s911, 128, 128, 8
        $region60: #{tpu_custom_call.1} parent=35 // pred_fallthru
          _
        // Predicated region
        $region61: #{tpu_custom_call.1} parent=35 // pred_check
          %p956 = pneg %p208
        $region62: #{tpu_custom_call.1} parent=35 // pred_check_branch
          %958 = sbr.rel (%p956) target = $region64
        $region63: #{tpu_custom_call.1} parent=35 // pred_region
          %s959 = smul.u32 16, %s34
          %s961 = ssub.s32 2048, 2048
          %962 = vsyncadd %s916, %s961
          %s963 = smul.addr %s33, 32
          %s964 = sadd.s32 %s959, %s963
          %s965 = smul.addr %s964, 128
          %s966 = scalar_lea.hbm %s6, %s965
          %s967 = sshll.u32 %s919, 4
          %s968 = int_to_ptr.vmem [resolvable:$true] %s967
          %973 = dma.vmem_to_hbm [thread:$0]  %s968, 2048, %s966, %s916, 128, 128, 8
        $region64: #{tpu_custom_call.1} parent=35 // pred_fallthru
          _
      $region36: #{tpu_custom_call.1} parent=5 // pred_fallthru
        _
      %p974 = scmp.le.s32.totalorder 2, %s24
      // Predicated region
      $region65: #{tpu_custom_call.1} parent=5 // pred_check
        %p975 = pneg %p974
      $region66: #{tpu_custom_call.1} parent=5 // pred_check_branch
        %977 = sbr.rel (%p975) target = $region68
      $region67: #{tpu_custom_call.1} parent=5 // pred_region
        %s978 = ssub.s32 %s24, 2
        // Predicated region
        $region69: #{tpu_custom_call.1} parent=67 // pred_check
          %p979 = pneg %p158
        $region70: #{tpu_custom_call.1} parent=67 // pred_check_branch
          %981 = sbr.rel (%p979) target = $region72
        $region71: #{tpu_custom_call.1} parent=67 // pred_region
          %s982 = sand.u32 %s143, 1
          %s983 = scalar_lea.sflag [#allocation4], %s982
          %s984 = sand.u32 %s143, 1
          %s985 = smul.addr %s984, 128
          %s986 = scalar_lea.vmem [#allocation10], %s985
          %987 = dma.done %s983, 2048
        $region72: #{tpu_custom_call.1} parent=67 // pred_fallthru
          _
        // Predicated region
        $region73: #{tpu_custom_call.1} parent=67 // pred_check
          %p988 = pneg %p186
        $region74: #{tpu_custom_call.1} parent=67 // pred_check_branch
          %990 = sbr.rel (%p988) target = $region76
        $region75: #{tpu_custom_call.1} parent=67 // pred_region
          %s991 = sand.u32 %s30, 1
          %s992 = scalar_lea.sflag [#allocation12], %s991
          %s993 = sand.u32 %s171, 1
          %s994 = smul.addr %s993, 128
          %s995 = scalar_lea.vmem [#allocation11], %s994
          %996 = dma.done %s992, 2048
        $region76: #{tpu_custom_call.1} parent=67 // pred_fallthru
          _
        // Predicated region
        $region77: #{tpu_custom_call.1} parent=67 // pred_check
          %p997 = pneg %p214
        $region78: #{tpu_custom_call.1} parent=67 // pred_check_branch
          %999 = sbr.rel (%p997) target = $region80
        $region79: #{tpu_custom_call.1} parent=67 // pred_region
          %s1000 = sand.u32 %s30, 1
          %s1001 = scalar_lea.sflag [#allocation12], %s1000
          %s1002 = sand.u32 %s199, 1
          %s1003 = smul.addr %s1002, 128
          %s1004 = scalar_lea.vmem [#allocation13], %s1003
          %1005 = dma.done %s1001, 2048
        $region80: #{tpu_custom_call.1} parent=67 // pred_fallthru
          _
      $region68: #{tpu_custom_call.1} parent=5 // pred_fallthru
        _
    $region6: #{tpu_custom_call.1} parent=1 // loop_footer
      %s28 = sadd.s32 1, %s24
    $region7: #{tpu_custom_call.1} parent=1 // loop_footer_branch
      %23 = sbr.rel target = $region3
    $region8: #{tpu_custom_call.1} parent=1 // loop_exit
      _
    %1006 = vsyncpa [#allocation3], 1
    %s1007 = scalar_lea.sflag [#allocation3], 1
    %1008 = vsyncpa %s1007, 1
    %1009 = vsyncpa [#allocation6], 1
    %1010 = vsyncpa [#allocation9], 1
    %1011 = vsyncpa [#allocation4], 1
    %s1012 = scalar_lea.sflag [#allocation4], 1
    %1013 = vsyncpa %s1012, 1
    %1014 = vsyncpa [#allocation12], 1
    %s1015 = scalar_lea.sflag [#allocation12], 1
    %1016 = vsyncpa %s1015, 1

</llo_original>
